<compile_context>
chip_gen: v6e
topology: v6e:2x2x1
jax: 0.10.0
libtpu: 0.0.40
codegen_flags: <defaults>
</compile_context>

<pallas_src>
import functools

import jax
import jax.numpy as jnp
from jax import lax
from jax.experimental import pallas as pl
from jax.experimental.pallas import tpu as pltpu

# Compile-time Python-float parameters of the synthetic simulation step.
DT = 1.0 / 90.0        # time step
K_ATTACH = 50.0        # attachment-spring stiffness toward `a`
DAMPING = 0.3          # velocity damping
GRAVITY = -9.8         # z-component gravity (unit mass)

LANE = 128
SUBLANE = 8


def _round_up(x, m):
    return -(-x // m) * m


def _cdiv(a, b):
    return -(-a // b)


def sim_step_kernel(x_ref, v_ref, a_ref, p_ref, xo_ref, vo_ref, *, num_steps):
    rows, _ = x_ref.shape  # static block shape, e.g. (2048, 128)

    # Gravity acts on the z component of each vertex, i.e. on global flat
    # indices with (flat % 3 == 2).  flat = row_idx*128 + lane, so with
    # r = (row_idx*2) % 3 (128 % 3 == 2) and l = lane % 3, flat%3==2 iff
    # l == 2 - r.  Only (rows,1)- and (1,128)-sized mod work + one broadcast
    # compare — no full-size iota/%3 over rows*128 elements.
    lane_mod = lax.broadcasted_iota(jnp.int32, (1, LANE), 1) % 3        # (1,128)
    row_idx = (pl.program_id(0) * rows
               + lax.broadcasted_iota(jnp.int32, (rows, 1), 0))         # (rows,1)
    target = 2 - (row_idx * (LANE % 3)) % 3                             # (rows,1)
    grav = jnp.where(lane_mod == target,
                     jnp.float32(GRAVITY), jnp.float32(0.0))            # (rows,128)

    a = a_ref[...]
    pg = p_ref[...] + grav        # control force + gravity: constant across steps

    def body(_, carry):
        x, v = carry
        # force = attachment springs + damping + (control + gravity), unit mass
        f = K_ATTACH * (a - x) - DAMPING * v + pg
        v = v + DT * f            # semi-implicit Euler
        x = x + DT * v
        return (x, v)

    x, v = lax.fori_loop(0, num_steps, body, (x_ref[...], v_ref[...]),
                         unroll=(num_steps <= 8))
    xo_ref[...] = x
    vo_ref[...] = v


@functools.partial(jax.jit, static_argnames=("num_steps", "max_block_rows"))
def pysim_forward(x_flat, v_flat, a_flat, p_flat, *, num_steps=1,
                  max_block_rows=2048):
    """num_steps fused simulation steps: flat (3N,) f32 -> (x_next, v_next)."""
    total = x_flat.shape[0]
    assert total % 3 == 0, "state must be a flat (3N,) vector"

    # Rows of the lane-dense (rows, 128) slab, rounded up to full vregs.
    rows_needed = _round_up(_cdiv(total, LANE), SUBLANE)

    if rows_needed <= SUBLANE:
        # Tiny problem: a single vreg row-group; can't split further.
        block_rows, grid_n = rows_needed, 1
    elif rows_needed <= 2 * max_block_rows:
        # Split into exactly 2 blocks so v7x's two TensorCores both work.
        block_rows = _round_up(_cdiv(rows_needed, 2), SUBLANE)
        grid_n = 2
    else:
        block_rows = max_block_rows       # 2048x128 f32 = 1 MiB per block
        grid_n = _cdiv(rows_needed, block_rows)
        if grid_n % 2:                    # even grid: no lone extra block per TC
            grid_n += 1

    padded_rows = grid_n * block_rows
    padded_total = padded_rows * LANE
    assert padded_total < 2**31, "flat index would overflow int32"

    def prep(arr):
        arr = jnp.asarray(arr, jnp.float32)
        pad = padded_total - total
        if pad:
            arr = jnp.pad(arr, (0, pad))  # once per call, amortized over steps
        return arr.reshape(padded_rows, LANE)

    xs, vs, as_, ps = prep(x_flat), prep(v_flat), prep(a_flat), prep(p_flat)

    spec = pl.BlockSpec((block_rows, LANE), lambda i: (i, 0))

    xo, vo = pl.pallas_call(
        functools.partial(sim_step_kernel, num_steps=num_steps),
        out_shape=(jax.ShapeDtypeStruct((padded_rows, LANE), jnp.float32),
                   jax.ShapeDtypeStruct((padded_rows, LANE), jnp.float32)),
        grid_spec=pltpu.PrefetchScalarGridSpec(
            num_scalar_prefetch=0,
            grid=(grid_n,),
            in_specs=[spec, spec, spec, spec],
            out_specs=(spec, spec),
        ),
        # x -> x_next, v -> v_next reuse the same HBM buffers (in-place step).
        input_output_aliases={0: 0, 1: 1},
        compiler_params=pltpu.CompilerParams(
            dimension_semantics=("parallel",),
            # 6 live blocks (4 in + 2 out) x 2 pipeline buffers x <=1 MiB ~= 12 MiB.
            vmem_limit_bytes=32 * 1024 * 1024,
        ),
    )(xs, vs, as_, ps)

    x_next = xo.reshape(-1)[:total]       # once per call, amortized over steps
    v_next = vo.reshape(-1)[:total]
    return x_next, v_next


def pysim_forward_ref(x, v, a, p, num_steps=1):
    """Pure-JAX reference of the same synthetic step(s)."""
    n = x.shape[0] // 3
    grav = jnp.tile(jnp.array([0.0, 0.0, GRAVITY], jnp.float32), n)
    for _ in range(num_steps):
        f = K_ATTACH * (a - x) - DAMPING * v + p + grav
        v = v + DT * f
        x = x + DT * v
    return x, v


def _make_inputs(key, n_verts):
    kx, kv, ka, kp = jax.random.split(key, 4)
    x = jax.random.normal(kx, (3 * n_verts,), dtype=jnp.float32)
    v = 0.1 * jax.random.normal(kv, (3 * n_verts,), dtype=jnp.float32)
    a = x + 0.05 * jax.random.normal(ka, (3 * n_verts,), dtype=jnp.float32)
    p = 0.01 * jax.random.normal(kp, (3 * n_verts,), dtype=jnp.float32)
    return x, v, a, p


if __name__ == "__main__":
    key = jax.random.PRNGKey(0)
    k1, k2 = jax.random.split(key)

    # Case 1: tiny cloth (256 vertices -> 768 DOF), single step, grid=(1,).
    x, v, a, p = _make_inputs(k1, 256)
    x_next, v_next = pysim_forward(x, v, a, p, num_steps=1)
    jax.block_until_ready((x_next, v_next))
    x_ref, v_ref = pysim_forward_ref(x, v, a, p, num_steps=1)
    assert x_next.shape == x.shape and v_next.shape == v.shape
    assert jnp.allclose(x_next, x_ref, atol=1e-4, rtol=1e-5)
    assert jnp.allclose(v_next, v_ref, atol=1e-4, rtol=1e-5)

    # Case 2: small cloth (1024 vertices -> 3072 DOF), 4 fused steps, grid=(2,)
    # (exercises the two-TensorCore split and the fused multi-step loop).
    x, v, a, p = _make_inputs(k2, 1024)
    x_next, v_next = pysim_forward(x, v, a, p, num_steps=4)
    jax.block_until_ready((x_next, v_next))
    x_ref, v_ref = pysim_forward_ref(x, v, a, p, num_steps=4)
    assert x_next.shape == x.shape and v_next.shape == v.shape
    assert jnp.allclose(x_next, x_ref, atol=1e-4, rtol=1e-5)
    assert jnp.allclose(v_next, v_ref, atol=1e-4, rtol=1e-5)

    print("KERNEL_OK")
</pallas_src>

<mosaic_0001>
module attributes {stable_mosaic.version = 11 : i64} {
  func.func @sim_step_kernel(%arg0: i32, %arg1: memref<8x128xf32, #tpu.memory_space<vmem>>, %arg2: memref<8x128xf32, #tpu.memory_space<vmem>>, %arg3: memref<8x128xf32, #tpu.memory_space<vmem>>, %arg4: memref<8x128xf32, #tpu.memory_space<vmem>>, %arg5: memref<8x128xf32, #tpu.memory_space<vmem>>, %arg6: memref<8x128xf32, #tpu.memory_space<vmem>>) attributes {dimension_semantics = [#tpu.dimension_semantics<parallel>], iteration_bounds = array<i64: 1>, scalar_prefetch = 0 : i64, scratch_operands = 0 : i64, tpu.core_type = #tpu.core_type<tc>, window_params = [{transform_indices = @transform_0, window_bounds = array<i64: 8, 128>}, {transform_indices = @transform_1, window_bounds = array<i64: 8, 128>}, {transform_indices = @transform_2, window_bounds = array<i64: 8, 128>}, {transform_indices = @transform_3, window_bounds = array<i64: 8, 128>}, {transform_indices = @transform_4, window_bounds = array<i64: 8, 128>}, {transform_indices = @transform_5, window_bounds = array<i64: 8, 128>}]} {
    %0 = tpu.iota {dimensions = array<i32: 1>} : vector<1x128xi32>
    %c3_i32 = arith.constant 3 : i32
    %c0_i32 = arith.constant 0 : i32
    %1 = arith.cmpi eq, %c3_i32, %c0_i32 : i32
    %c1_i32 = arith.constant 1 : i32
    %2 = arith.select %1, %c1_i32, %c3_i32 : i32
    %3 = vector.broadcast %2 : i32 to vector<1x128xi32>
    %4 = arith.remsi %0, %3 : vector<1x128xi32>
    %c0_i32_0 = arith.constant 0 : i32
    %5 = vector.broadcast %c0_i32_0 : i32 to vector<1x128xi32>
    %6 = arith.cmpi ne, %4, %5 : vector<1x128xi32>
    %c0_i32_1 = arith.constant 0 : i32
    %7 = vector.broadcast %c0_i32_1 : i32 to vector<1x128xi32>
    %8 = arith.cmpi slt, %4, %7 : vector<1x128xi32>
    %c0_i32_2 = arith.constant 0 : i32
    %9 = arith.cmpi slt, %2, %c0_i32_2 : i32
    %10 = vector.broadcast %9 : i1 to vector<1x128xi1>
    %11 = vector.broadcast %10 : vector<1x128xi1> to vector<1x128xi1>
    %12 = arith.xori %8, %11 : vector<1x128xi1>
    %13 = arith.andi %12, %6 : vector<1x128xi1>
    %14 = vector.broadcast %2 : i32 to vector<1x128xi32>
    %15 = arith.addi %4, %14 : vector<1x128xi32>
    %16 = arith.select %13, %15, %4 : vector<1x128xi1>, vector<1x128xi32>
    %c8_i32 = arith.constant 8 : i32
    %17 = arith.muli %arg0, %c8_i32 : i32
    %18 = tpu.iota {dimensions = array<i32: 0>} : vector<8x1xi32>
    %19 = vector.broadcast %17 : i32 to vector<8x1xi32>
    %20 = arith.addi %19, %18 : vector<8x1xi32>
    %c2_i32 = arith.constant 2 : i32
    %21 = vector.broadcast %c2_i32 : i32 to vector<8x1xi32>
    %22 = arith.muli %20, %21 : vector<8x1xi32>
    %c3_i32_3 = arith.constant 3 : i32
    %c0_i32_4 = arith.constant 0 : i32
    %23 = arith.cmpi eq, %c3_i32_3, %c0_i32_4 : i32
    %c1_i32_5 = arith.constant 1 : i32
    %24 = arith.select %23, %c1_i32_5, %c3_i32_3 : i32
    %25 = vector.broadcast %24 : i32 to vector<8x1xi32>
    %26 = arith.remsi %22, %25 : vector<8x1xi32>
    %c0_i32_6 = arith.constant 0 : i32
    %27 = vector.broadcast %c0_i32_6 : i32 to vector<8x1xi32>
    %28 = arith.cmpi ne, %26, %27 : vector<8x1xi32>
    %c0_i32_7 = arith.constant 0 : i32
    %29 = vector.broadcast %c0_i32_7 : i32 to vector<8x1xi32>
    %30 = arith.cmpi slt, %26, %29 : vector<8x1xi32>
    %c0_i32_8 = arith.constant 0 : i32
    %31 = arith.cmpi slt, %24, %c0_i32_8 : i32
    %32 = vector.broadcast %31 : i1 to vector<8x1xi1>
    %33 = vector.broadcast %32 : vector<8x1xi1> to vector<8x1xi1>
    %34 = arith.xori %30, %33 : vector<8x1xi1>
    %35 = arith.andi %34, %28 : vector<8x1xi1>
    %36 = vector.broadcast %24 : i32 to vector<8x1xi32>
    %37 = arith.addi %26, %36 : vector<8x1xi32>
    %38 = arith.select %35, %37, %26 : vector<8x1xi1>, vector<8x1xi32>
    %c2_i32_9 = arith.constant 2 : i32
    %39 = vector.broadcast %c2_i32_9 : i32 to vector<8x1xi32>
    %40 = arith.subi %39, %38 : vector<8x1xi32>
    %41 = vector.broadcast %16 : vector<1x128xi32> to vector<8x128xi32>
    %42 = vector.broadcast %40 : vector<8x1xi32> to vector<8x128xi32>
    %43 = arith.cmpi eq, %41, %42 : vector<8x128xi32>
    %cst = arith.constant -9.800000e+00 : f32
    %cst_10 = arith.constant 0.000000e+00 : f32
    %44 = vector.broadcast %cst : f32 to vector<8x128xf32>
    %45 = vector.broadcast %cst_10 : f32 to vector<8x128xf32>
    %46 = arith.select %43, %44, %45 : vector<8x128xi1>, vector<8x128xf32>
    %c0 = arith.constant 0 : index
    %c0_11 = arith.constant 0 : index
    %47 = vector.load %arg3[%c0, %c0_11] : memref<8x128xf32, #tpu.memory_space<vmem>>, vector<8x128xf32>
    %c0_12 = arith.constant 0 : index
    %c0_13 = arith.constant 0 : index
    %48 = vector.load %arg4[%c0_12, %c0_13] : memref<8x128xf32, #tpu.memory_space<vmem>>, vector<8x128xf32>
    %49 = arith.addf %48, %46 : vector<8x128xf32>
    %c0_14 = arith.constant 0 : index
    %c0_15 = arith.constant 0 : index
    %50 = vector.load %arg1[%c0_14, %c0_15] : memref<8x128xf32, #tpu.memory_space<vmem>>, vector<8x128xf32>
    %c0_16 = arith.constant 0 : index
    %c0_17 = arith.constant 0 : index
    %51 = vector.load %arg2[%c0_16, %c0_17] : memref<8x128xf32, #tpu.memory_space<vmem>>, vector<8x128xf32>
    %c0_i32_18 = arith.constant 0 : i32
    %52 = arith.subf %47, %50 : vector<8x128xf32>
    %cst_19 = arith.constant 5.000000e+01 : f32
    %53 = vector.broadcast %cst_19 : f32 to vector<8x128xf32>
    %54 = arith.mulf %53, %52 : vector<8x128xf32>
    %cst_20 = arith.constant 3.000000e-01 : f32
    %55 = vector.broadcast %cst_20 : f32 to vector<8x128xf32>
    %56 = arith.mulf %55, %51 : vector<8x128xf32>
    %57 = arith.subf %54, %56 : vector<8x128xf32>
    %58 = arith.addf %57, %49 : vector<8x128xf32>
    %cst_21 = arith.constant 0.0111111114 : f32
    %59 = vector.broadcast %cst_21 : f32 to vector<8x128xf32>
    %60 = arith.mulf %59, %58 : vector<8x128xf32>
    %61 = arith.addf %51, %60 : vector<8x128xf32>
    %cst_22 = arith.constant 0.0111111114 : f32
    %62 = vector.broadcast %cst_22 : f32 to vector<8x128xf32>
    %63 = arith.mulf %62, %61 : vector<8x128xf32>
    %64 = arith.addf %50, %63 : vector<8x128xf32>
    %c0_23 = arith.constant 0 : index
    %c0_24 = arith.constant 0 : index
    %65 = vector.load %arg5[%c0_23, %c0_24] : memref<8x128xf32, #tpu.memory_space<vmem>>, vector<8x128xf32>
    tpu.vector_store %arg5[%c0_23, %c0_24], %64 {strides = array<i32>} : memref<8x128xf32, #tpu.memory_space<vmem>>, vector<8x128xf32>,
    %c0_25 = arith.constant 0 : index
    %c0_26 = arith.constant 0 : index
    %66 = vector.load %arg6[%c0_25, %c0_26] : memref<8x128xf32, #tpu.memory_space<vmem>>, vector<8x128xf32>
    tpu.vector_store %arg6[%c0_25, %c0_26], %61 {strides = array<i32>} : memref<8x128xf32, #tpu.memory_space<vmem>>, vector<8x128xf32>,
    return
  }
  func.func @transform_0(%arg0: i32) -> (i32, i32) {
    %c0_i32 = arith.constant 0 : i32
    %c0_i32_0 = arith.constant 0 : i32
    return %arg0, %c0_i32 : i32, i32
  }
  func.func @transform_1(%arg0: i32) -> (i32, i32) {
    %c0_i32 = arith.constant 0 : i32
    %c0_i32_0 = arith.constant 0 : i32
    return %arg0, %c0_i32 : i32, i32
  }
  func.func @transform_2(%arg0: i32) -> (i32, i32) {
    %c0_i32 = arith.constant 0 : i32
    %c0_i32_0 = arith.constant 0 : i32
    return %arg0, %c0_i32 : i32, i32
  }
  func.func @transform_3(%arg0: i32) -> (i32, i32) {
    %c0_i32 = arith.constant 0 : i32
    %c0_i32_0 = arith.constant 0 : i32
    return %arg0, %c0_i32 : i32, i32
  }
  func.func @transform_4(%arg0: i32) -> (i32, i32) {
    %c0_i32 = arith.constant 0 : i32
    %c0_i32_0 = arith.constant 0 : i32
    return %arg0, %c0_i32 : i32, i32
  }
  func.func @transform_5(%arg0: i32) -> (i32, i32) {
    %c0_i32 = arith.constant 0 : i32
    %c0_i32_0 = arith.constant 0 : i32
    return %arg0, %c0_i32 : i32, i32
  }
}

</mosaic_0001>

<llo_original>
// kernel: pysim_forward.1
$region0: #{pysim_forward.1}
  #allocation0 [shape = 'u32[]', space=smem, size = 0x4, offset = 0x4, fixed_abs, tag = 'smem constant byte address 0x4 - core index']
  #allocation1 [shape = 'u32[144,128]{1,0:T(1,128)}', space=vmem, size = 0x12000, scoped, tag = 'internal scratch']
  %s0 = inlined_call_operand.vmem [shape: f32[8,128], index: 0, kind: input, shape index: {}, may-alias: {0,4}]
  %s1 = inlined_call_operand.vmem [shape: f32[8,128], index: 1, kind: input, shape index: {}, may-alias: {1,5}]
  %s2 = inlined_call_operand.vmem [shape: f32[8,128], index: 2, kind: input, shape index: {}]
  %s3 = inlined_call_operand.vmem [shape: f32[8,128], index: 3, kind: input, shape index: {}]
  %s4 = inlined_call_operand.vmem [shape: f32[8,128], index: 4, kind: output, shape index: {0}, may-alias: {0,4}]
  %s5 = inlined_call_operand.vmem [shape: f32[8,128], index: 5, kind: output, shape index: {1}, may-alias: {1,5}]
  %6 = xla_tuple %s4, %s5
  %s7 = sld [smem:[#allocation0]]
  $region34: #{pysim_forward.1} parent=0
    _
  %s9 = ssub.s32 1, %s7
  %s10 = scalar_select 0, %s9, %s7
  // Predicated region
  $region2: #{pysim_forward.1} parent=0 // pred_check
    _
  $region3: #{pysim_forward.1} parent=0 // pred_check_branch
    %12 = sbr.rel (0) target = $region5
  $region4: #{pysim_forward.1} parent=0 // pred_region
    _
  $region5: #{pysim_forward.1} parent=0 // pred_fallthru
    _
  // Predicated region
  $region6: #{pysim_forward.1} parent=0 // pred_check
    _
  $region7: #{pysim_forward.1} parent=0 // pred_check_branch
    %14 = sbr.rel (0) target = $region9
  $region8: #{pysim_forward.1} parent=0 // pred_region
    _
  $region9: #{pysim_forward.1} parent=0 // pred_fallthru
    _
  // Predicated region
  $region10: #{pysim_forward.1} parent=0 // pred_check
    _
  $region11: #{pysim_forward.1} parent=0 // pred_check_branch
    %16 = sbr.rel (0) target = $region13
  $region12: #{pysim_forward.1} parent=0 // pred_region
    _
  $region13: #{pysim_forward.1} parent=0 // pred_fallthru
    _
  // Predicated region
  $region14: #{pysim_forward.1} parent=0 // pred_check
    _
  $region15: #{pysim_forward.1} parent=0 // pred_check_branch
    %18 = sbr.rel (0) target = $region17
  $region16: #{pysim_forward.1} parent=0 // pred_region
    _
  $region17: #{pysim_forward.1} parent=0 // pred_fallthru
    _
  %v19 = vlaneseq
  %v20 = vand.u32 %v19, 127
  %vm21 = vcmp.lt.s32.totalorder %v20, 0
  %v22 = vsub.s32 0, %v20
  %v23 = vsel %vm21, %v22, %v20
  %v24 = vmul.u32.u64.compose %v23, 2863311531
  %v25 = vextract.low.u32 %v24
  %v26 = vextract.high.u32 %v24
  %v27 = vshrl.u32 %v26, 1
  %v28 = vmul.u32 %v27, 3
  %v29 = vsub.s32 %v23, %v28
  %v30 = vsub.s32 0, %v29
  %v31 = vsel %vm21, %v30, %v29
  %vm32 = vcmp.ne.s32.totalorder %v31, 0
  %vm33 = vcmp.lt.s32.totalorder %v31, 0
  %vm34 = vmand %vm33, %vm32
  %v35 = vadd.s32 %v31, 3
  %v36 = vsel %vm34, %v35, %v31
  %s37 = smul.u32 0, 8
  %v38 = vlaneseq
  %v39 = vshrl.u32 %v38, 7
  %v40 = vstv %s37
  %v41 = vadd.s32 %v40, %v39
  %v42 = vmul.u32 %v41, 2
  %vm43 = vcmp.lt.s32.totalorder %v42, 0
  %v44 = vsub.s32 0, %v42
  %v45 = vsel %vm43, %v44, %v42
  %v46 = vmul.u32.u64.compose %v45, 2863311531
  %v47 = vextract.low.u32 %v46
  %v48 = vextract.high.u32 %v46
  %v49 = vshrl.u32 %v48, 1
  %v50 = vmul.u32 %v49, 3
  %v51 = vsub.s32 %v45, %v50
  %v52 = vsub.s32 0, %v51
  %v53 = vsel %vm43, %v52, %v51
  %vm54 = vcmp.ne.s32.totalorder %v53, 0
  %vm55 = vcmp.lt.s32.totalorder %v53, 0
  %vm56 = vmand %vm55, %vm54
  %v57 = vadd.s32 %v53, 3
  %v58 = vsel %vm56, %v57, %v53
  %v59 = vsub.s32 2, %v58
  %vm60 = vcmp.eq.s32.totalorder %v36, %v59
  %v61 = vsel %vm60, -9.8, 0.0
  %v62 = vld [vmem:[%s2] sm:$0xff]
  %v63 = vld [vmem:[%s3] sm:$0xff]
  %v64 = vadd.f32 %v63, %v61
  %v65 = vld [vmem:[%s0] sm:$0xff]
  %v66 = vld [vmem:[%s1] sm:$0xff]
  %v67 = vsub.f32 %v62, %v65
  %v68 = vmul.f32 %v67, 50.0
  %v69 = vmul.f32 %v66, 0.3
  %v70 = vsub.f32 %v68, %v69
  %v71 = vadd.f32 %v70, %v64
  %v72 = vmul.f32 %v71, 0.011111111
  %v73 = vadd.f32 %v66, %v72
  %v74 = vmul.f32 %v73, 0.011111111
  %v75 = vadd.f32 %v65, %v74
  %76 = vst [vmem:[%s4] sm:$0xff] %v75
  %77 = vst [vmem:[%s5] sm:$0xff] %v73
  // Predicated region
  $region18: #{pysim_forward.1} parent=0 // pred_check
    _
  $region19: #{pysim_forward.1} parent=0 // pred_check_branch
    %79 = sbr.rel (0) target = $region21
  $region20: #{pysim_forward.1} parent=0 // pred_region
    _
  $region21: #{pysim_forward.1} parent=0 // pred_fallthru
    _
  // Predicated region
  $region22: #{pysim_forward.1} parent=0 // pred_check
    _
  $region23: #{pysim_forward.1} parent=0 // pred_check_branch
    %81 = sbr.rel (0) target = $region25
  $region24: #{pysim_forward.1} parent=0 // pred_region
    _
  $region25: #{pysim_forward.1} parent=0 // pred_fallthru
    _
  // Predicated region
  $region26: #{pysim_forward.1} parent=0 // pred_check
    _
  $region27: #{pysim_forward.1} parent=0 // pred_check_branch
    %83 = sbr.rel (0) target = $region29
  $region28: #{pysim_forward.1} parent=0 // pred_region
    _
  $region29: #{pysim_forward.1} parent=0 // pred_fallthru
    _
  // Predicated region
  $region30: #{pysim_forward.1} parent=0 // pred_check
    _
  $region31: #{pysim_forward.1} parent=0 // pred_check_branch
    %85 = sbr.rel (0) target = $region33
  $region32: #{pysim_forward.1} parent=0 // pred_region
    _
  $region33: #{pysim_forward.1} parent=0 // pred_fallthru
    _

</llo_original>
